<compile_context>
chip_gen: v7x
topology: tpu7x:2x2x1
jax: 0.10.0
libtpu: 0.0.40
codegen_flags: <defaults>
</compile_context>

<pallas_src>
import jax
import jax.numpy as jnp
from jax.experimental import pallas as pl
from jax.experimental.pallas import tpu as pltpu


def _round_up(x, m):
    return (x + m - 1) // m * m


def conv_stats_kernel(x_ref, w_ref, h_ref, s_ref):
    # x_ref: (tile_rows, KC_pad) im2col rows   w_ref: (KC_pad, C_pad) taps
    # h_ref: (tile_rows, C_pad) conv output    s_ref: (1, 2, C_pad) [s1, s2]
    h = jnp.dot(x_ref[...], w_ref[...], preferred_element_type=jnp.float32)
    h_ref[...] = h
    # Zero-padded rows (and zero-padded contraction lanes) contribute exactly
    # zero to both sums, so no validity mask is required here.
    s_ref[0, 0:1, :] = jnp.sum(h, axis=0, keepdims=True)
    s_ref[0, 1:2, :] = jnp.sum(h * h, axis=0, keepdims=True)


def bn_apply_kernel(h_ref, ss_ref, o_ref):
    # ss_ref rows: [0] = gamma * rsqrt(var + eps), [1] = beta - mean * scale.
    o_ref[...] = h_ref[...] * ss_ref[0:1, :] + ss_ref[1:2, :]


def unit_tcn_forward(x, w, b, gamma, beta, *, stride=1, eps=1e-5, tile_rows=512):
    """unit_tcn forward: BatchNorm2d(Conv2d_{(K,1)}(x)), training-mode BN stats.

    x: (N, C_in, T, V) f32; w: (C_out, C_in, K, 1) PyTorch layout;
    b / gamma / beta: (C_out,).  Returns (N, C_out, T_out, V) f32.

    Note: the conv bias `b` is a per-channel constant, so it cancels exactly
    under training-mode BatchNorm (mean subtraction) and never enters the
    kernels; it is kept in the signature for interface fidelity.
    """
    N, C_in, T, V = x.shape
    C_out, _, K, _ = w.shape
    pad = (K - 1) // 2
    T_out = (T + 2 * pad - K) // stride + 1

    # ---- wrapper-side im2col: fold the K temporal taps into the lane axis ---
    # TODO(synk): for production-scale N*T*V, fold the im2col into pass 1 via
    # Element-offset index_maps on a padded (N*V*T_pad, C_in) slab to avoid
    # materializing the K*C_in-wide im2col buffer in HBM.
    x_cl = jnp.transpose(x, (0, 3, 2, 1)).astype(jnp.float32)       # (N,V,T,Ci)
    x_cl = jnp.pad(x_cl, ((0, 0), (0, 0), (pad, pad), (0, 0)))      # (N,V,T+2p,Ci)
    taps = [x_cl[:, :, k:k + stride * (T_out - 1) + 1:stride, :] for k in range(K)]
    x_im = jnp.concatenate(taps, axis=-1)                           # (N,V,T_out,K*Ci)

    L = N * V * T_out
    KC = K * C_in
    KC_pad = _round_up(KC, 128)                # MXU-aligned contraction depth
    C_pad = _round_up(C_out, 128)              # lane-dense output channels
    tile_rows = min(tile_rows, _round_up(L, 8))
    L_pad = _round_up(L, tile_rows)
    num_tiles = L_pad // tile_rows

    x2 = jnp.pad(x_im.reshape(L, KC), ((0, L_pad - L), (0, KC_pad - KC)))
    w2 = jnp.pad(
        jnp.transpose(w[:, :, :, 0], (2, 1, 0)).reshape(KC, C_out).astype(jnp.float32),
        ((0, KC_pad - KC), (0, C_pad - C_out)))

    cparams = pltpu.CompilerParams(
        dimension_semantics=("parallel",),
        vmem_limit_bytes=32 * 1024 * 1024)

    # ---- pass 1: conv matmul + per-tile partial BN sums ---------------------
    h, part = pl.pallas_call(
        conv_stats_kernel,
        out_shape=(jax.ShapeDtypeStruct((L_pad, C_pad), jnp.float32),
                   jax.ShapeDtypeStruct((num_tiles, 2, C_pad), jnp.float32)),
        grid_spec=pltpu.PrefetchScalarGridSpec(
            num_scalar_prefetch=0,
            grid=(num_tiles,),
            in_specs=[pl.BlockSpec((tile_rows, KC_pad), lambda i: (i, 0)),
                      pl.BlockSpec((KC_pad, C_pad), lambda i: (0, 0))],
            out_specs=(pl.BlockSpec((tile_rows, C_pad), lambda i: (i, 0)),
                       pl.BlockSpec((1, 2, C_pad), lambda i: (i, 0, 0)))),
        compiler_params=cparams,
    )(x2, w2)

    # ---- tiny O(C) finalize in plain JAX: batch stats -> fused BN affine ----
    s = jnp.sum(part, axis=0)                      # (2, C_pad)
    inv_count = 1.0 / float(L)
    mean = s[0] * inv_count
    var = jnp.maximum(s[1] * inv_count - mean * mean, 0.0)
    # TODO(synk): for extreme activation scales, use a shifted / two-pass
    # variance instead of E[x^2] - E[x]^2 to avoid cancellation.
    gamma_p = jnp.pad(gamma.astype(jnp.float32), (0, C_pad - C_out))
    beta_p = jnp.pad(beta.astype(jnp.float32), (0, C_pad - C_out))
    scale = gamma_p * jax.lax.rsqrt(var + eps)
    shift = beta_p - mean * scale
    ss = jnp.stack([scale, shift], axis=0)         # (2, C_pad)

    # ---- pass 2: lane-dense normalize ---------------------------------------
    out2 = pl.pallas_call(
        bn_apply_kernel,
        out_shape=jax.ShapeDtypeStruct((L_pad, C_pad), jnp.float32),
        grid_spec=pltpu.PrefetchScalarGridSpec(
            num_scalar_prefetch=0,
            grid=(num_tiles,),
            in_specs=[pl.BlockSpec((tile_rows, C_pad), lambda i: (i, 0)),
                      pl.BlockSpec((2, C_pad), lambda i: (0, 0))],
            out_specs=pl.BlockSpec((tile_rows, C_pad), lambda i: (i, 0))),
        compiler_params=cparams,
    )(h, ss)

    # Drop row/channel padding and restore (N, C_out, T_out, V).
    out = out2[:L, :C_out].reshape(N, V, T_out, C_out)
    return jnp.transpose(out, (0, 3, 2, 1))


def reference_unit_tcn(x, w, b, gamma, beta, *, stride=1, eps=1e-5):
    """Pure-JAX reference matching PyTorch unit_tcn.forward in training mode."""
    pad = (w.shape[2] - 1) // 2
    y = jax.lax.conv_general_dilated(
        x, w, window_strides=(stride, 1), padding=((pad, pad), (0, 0)),
        dimension_numbers=('NCHW', 'OIHW', 'NCHW'))
    y = y + b.reshape(1, -1, 1, 1)
    mean = jnp.mean(y, axis=(0, 2, 3), keepdims=True)
    var = jnp.mean((y - mean) ** 2, axis=(0, 2, 3), keepdims=True)
    y = (y - mean) * jax.lax.rsqrt(var + eps)
    return y * gamma.reshape(1, -1, 1, 1) + beta.reshape(1, -1, 1, 1)


if __name__ == "__main__":
    # Small shapes consistent with the module: x (N=2, C_in=4, T=16, V=25),
    # out_channels=8, kernel_size=9 (default).  V=25 makes the row count a
    # non-multiple of the tile so the row-padding path is exercised.
    N, C_IN, C_OUT, T, V, K = 2, 4, 8, 16, 25, 9

    key = jax.random.PRNGKey(0)
    kx, kw, kb, kg, kbt = jax.random.split(key, 5)

    x = jax.random.normal(kx, (N, C_IN, T, V), dtype=jnp.float32)

    # Kaiming-normal-like conv weight (mode='fan_out') + non-trivial bias /
    # gamma / beta so every parameter path is exercised.
    fan_out = C_OUT * K * 1
    w = jax.random.normal(kw, (C_OUT, C_IN, K, 1), dtype=jnp.float32) * (2.0 / fan_out) ** 0.5
    b = 0.1 * jax.random.normal(kb, (C_OUT,), dtype=jnp.float32)
    gamma = 1.0 + 0.1 * jax.random.normal(kg, (C_OUT,), dtype=jnp.float32)
    beta = 0.1 * jax.random.normal(kbt, (C_OUT,), dtype=jnp.float32)

    for stride in (1, 2):
        out = jax.block_until_ready(
            unit_tcn_forward(x, w, b, gamma, beta, stride=stride))
        ref = reference_unit_tcn(x, w, b, gamma, beta, stride=stride)
        assert out.shape == ref.shape, (stride, out.shape, ref.shape)
        max_err = float(jnp.max(jnp.abs(out - ref)))
        assert max_err < 1e-4, (stride, max_err)

    print("KERNEL_OK")
</pallas_src>

<mosaic_0001>
module attributes {stable_mosaic.version = 11 : i64} {
  func.func @conv_stats_kernel(%arg0: i32, %arg1: memref<512x128xf32, #tpu.memory_space<vmem>>, %arg2: memref<128x128xf32, #tpu.memory_space<vmem>>, %arg3: memref<512x128xf32, #tpu.memory_space<vmem>>, %arg4: memref<1x2x128xf32, #tpu.memory_space<vmem>>) attributes {dimension_semantics = [#tpu.dimension_semantics<parallel>], iteration_bounds = array<i64: 2>, scalar_prefetch = 0 : i64, scratch_operands = 0 : i64, tpu.core_type = #tpu.core_type<tc>, window_params = [{transform_indices = @transform_0, window_bounds = array<i64: 512, 128>}, {pipeline_mode = #tpu.pipeline_mode<synchronous>, transform_indices = @transform_1, window_bounds = array<i64: 128, 128>}, {transform_indices = @transform_2, window_bounds = array<i64: 512, 128>}, {transform_indices = @transform_3, window_bounds = array<i64: 1, 2, 128>}]} {
    %c0 = arith.constant 0 : index
    %c0_0 = arith.constant 0 : index
    %0 = vector.load %arg1[%c0, %c0_0] : memref<512x128xf32, #tpu.memory_space<vmem>>, vector<512x128xf32>
    %c0_1 = arith.constant 0 : index
    %c0_2 = arith.constant 0 : index
    %1 = vector.load %arg2[%c0_1, %c0_2] : memref<128x128xf32, #tpu.memory_space<vmem>>, vector<128x128xf32>
    %cst = arith.constant dense<0.000000e+00> : vector<512x128xf32>
    %2 = tpu.matmul %0, %1, %cst {dimension_numbers = #tpu.dot_dimension_numbers<[1], [0], [0], [1], [0, 0, 1, 1], [], []>} : vector<512x128xf32>, vector<128x128xf32>, vector<512x128xf32> -> vector<512x128xf32>
    %c0_3 = arith.constant 0 : index
    %c0_4 = arith.constant 0 : index
    %3 = vector.load %arg3[%c0_3, %c0_4] : memref<512x128xf32, #tpu.memory_space<vmem>>, vector<512x128xf32>
    tpu.vector_store %arg3[%c0_3, %c0_4], %2 {strides = array<i32>} : memref<512x128xf32, #tpu.memory_space<vmem>>, vector<512x128xf32>,
    %cst_5 = arith.constant dense<0.000000e+00> : vector<128xf32>
    %4 = vector.multi_reduction <add>, %2, %cst_5 [0] : vector<512x128xf32> to vector<128xf32>
    %5 = vector.shape_cast %4 : vector<128xf32> to vector<1x128xf32>
    %c0_6 = arith.constant 0 : index
    %c0_7 = arith.constant 0 : index
    %c0_8 = arith.constant 0 : index
    %6 = vector.load %arg4[%c0_6, %c0_7, %c0_8] : memref<1x2x128xf32, #tpu.memory_space<vmem>>, vector<1x1x128xf32>
    %7 = vector.shape_cast %6 : vector<1x1x128xf32> to vector<1x128xf32>
    %8 = vector.shape_cast %5 : vector<1x128xf32> to vector<1x1x128xf32>
    tpu.vector_store %arg4[%c0_6, %c0_7, %c0_8], %8 {strides = array<i32>} : memref<1x2x128xf32, #tpu.memory_space<vmem>>, vector<1x1x128xf32>,
    %9 = arith.mulf %2, %2 : vector<512x128xf32>
    %cst_9 = arith.constant dense<0.000000e+00> : vector<128xf32>
    %10 = vector.multi_reduction <add>, %9, %cst_9 [0] : vector<512x128xf32> to vector<128xf32>
    %11 = vector.shape_cast %10 : vector<128xf32> to vector<1x128xf32>
    %c0_10 = arith.constant 0 : index
    %c1 = arith.constant 1 : index
    %c0_11 = arith.constant 0 : index
    %12 = vector.load %arg4[%c0_10, %c1, %c0_11] : memref<1x2x128xf32, #tpu.memory_space<vmem>>, vector<1x1x128xf32>
    %13 = vector.shape_cast %12 : vector<1x1x128xf32> to vector<1x128xf32>
    %14 = vector.shape_cast %11 : vector<1x128xf32> to vector<1x1x128xf32>
    tpu.vector_store %arg4[%c0_10, %c1, %c0_11], %14 {strides = array<i32>} : memref<1x2x128xf32, #tpu.memory_space<vmem>>, vector<1x1x128xf32>,
    return
  }
  func.func @transform_0(%arg0: i32) -> (i32, i32) {
    %c0_i32 = arith.constant 0 : i32
    %c0_i32_0 = arith.constant 0 : i32
    return %arg0, %c0_i32 : i32, i32
  }
  func.func @transform_1(%arg0: i32) -> (i32, i32) {
    %c0_i32 = arith.constant 0 : i32
    %c0_i32_0 = arith.constant 0 : i32
    %c0_i32_1 = arith.constant 0 : i32
    return %c0_i32, %c0_i32_0 : i32, i32
  }
  func.func @transform_2(%arg0: i32) -> (i32, i32) {
    %c0_i32 = arith.constant 0 : i32
    %c0_i32_0 = arith.constant 0 : i32
    return %arg0, %c0_i32 : i32, i32
  }
  func.func @transform_3(%arg0: i32) -> (i32, i32, i32) {
    %c0_i32 = arith.constant 0 : i32
    %c0_i32_0 = arith.constant 0 : i32
    %c0_i32_1 = arith.constant 0 : i32
    return %arg0, %c0_i32, %c0_i32_0 : i32, i32, i32
  }
}

</mosaic_0001>

<llo_original>
// kernel: tpu_custom_call.1
$region0: #{tpu_custom_call.1}
  #allocation0 [shape = 'u32[]', space=smem, size = 0x4, offset = 0x4, fixed_abs, tag = 'smem constant byte address 0x4 - core index']
  #allocation1 [shape = 'u32[144,128]{1,0:T(1,128)}', space=vmem, size = 0x12000, scoped, tag = 'internal scratch']
  %s0 = inlined_call_operand.hbm [shape: f32[1024,128], index: 0, kind: input, shape index: {}]
  %s1 = inlined_call_operand.hbm [shape: f32[128,128], index: 1, kind: input, shape index: {}]
  %s2 = inlined_call_operand.hbm [shape: f32[1024,128], index: 2, kind: output, shape index: {0}]
  %s3 = inlined_call_operand.hbm [shape: f32[2,2,128], index: 3, kind: output, shape index: {1}]
  %4 = xla_tuple %s2, %s3
  %s5 = sld [smem:[#allocation0]]
  $region57: #{tpu_custom_call.1} parent=0
    _
  %s7 = ssub.s32 1, %s5
  %s8 = scalar_select 0, %s7, %s5
  $region1: #{tpu_custom_call.1} parent=0
    #allocation2 [shape = 'u8[524288]{0}', space=vmem, size = 0x80000, scoped, tag = 'input window, operand 0']
    #allocation3 [shape = 's32[2]{0}', space=sflag, size = 0x8, scoped, tag = 'scoped memory for tpu_custom_call.1']
    #allocation4 [shape = 's32[2]{0}', space=sflag, size = 0x8, scoped, tag = 'scoped memory for tpu_custom_call.1']
    #allocation5 [shape = 'u8[65536]{0}', space=vmem, size = 0x10000, scoped, tag = 'input window, operand 1, single buffered']
    #allocation6 [shape = 's32[1]{0}', space=sflag, size = 0x4, scoped, tag = 'scoped memory for tpu_custom_call.1']
    #allocation7 [shape = 'u8[524288]{0}', space=vmem, size = 0x80000, scoped, tag = 'output window, operand 0']
    #allocation8 [shape = 'u8[2048]{0}', space=vmem, size = 0x800, scoped, tag = 'output window, operand 1']
    #allocation9 [shape = 's32[2]{0}', space=sflag, size = 0x8, scoped, tag = 'scoped memory for tpu_custom_call.1']
    %9 = vsyncpa [#allocation3], 0
    %s10 = scalar_lea.sflag [#allocation3], 1
    %11 = vsyncpa %s10, 0
    %12 = vsyncpa [#allocation6], 0
    %13 = vsyncpa [#allocation4], 0
    %s14 = scalar_lea.sflag [#allocation4], 1
    %15 = vsyncpa %s14, 0
    %16 = vsyncpa [#allocation9], 0
    %s17 = scalar_lea.sflag [#allocation9], 1
    %18 = vsyncpa %s17, 0
    loop: start=0, step=1, limit=4
    $region2: #{tpu_custom_call.1} parent=1 // loop_pre_header
      _
    $region3: #{tpu_custom_call.1} parent=1 // loop_header
      %s20 = sphi 0, %s24
      %p21 = scmp.ge.s32.totalorder %s20, 4
      %s30 = sphi 0, %s32
      %s33 = sphi 0, %s30
      %s34 = sphi 0, %s33
      %s50 = sphi 0, %s34
      %s54 = sphi 0, %s54
      %s56 = sphi 0, %s54
      %s57 = sphi 0, %s56
      %s71 = sphi 0, %s57
      %s77 = sphi 0, %s79
      %s80 = sphi 0, %s77
      %s81 = sphi 0, %s80
      %s97 = sphi 0, %s81
      %s103 = sphi 0, %s105
      %s106 = sphi 0, %s103
      %s107 = sphi 0, %s106
      %s123 = sphi 0, %s107
    $region4: #{tpu_custom_call.1} parent=1 // loop_header_branch
      %23 = sbr.rel (%p21) target = $region8
    $region5: #{tpu_custom_call.1} parent=1 // loop_body
      %s25 = ssub.s32 %s20, 1
      %s26 = ssub.s32 %s20, 2
      %s27 = sadd.s32 %s20, 1
      %s28 = ssub.s32 %s20, %s27
      %p29 = scmp.eq.s32.totalorder %s28, 0
      %s31 = sadd.s32 %s30, 1
      %s32 = scalar_select %p29, %s30, %s31
      %p35 = pneg %p29
      %p36 = scmp.eq.s32.totalorder %s20, 1
      %p37 = por %p35, %p36
      %p38 = scmp.ne.s32.totalorder %s30, %s33
      %p39 = scmp.eq.s32.totalorder %s20, 0
      %p40 = por %p38, %p39
      %p41 = scmp.ne.s32.totalorder %s30, %s33
      %p42 = scmp.eq.s32.totalorder %s25, 1
      %p43 = por %p41, %p42
      %p44 = scmp.ne.s32.totalorder %s33, %s34
      %p45 = scmp.eq.s32.totalorder %s25, 0
      %p46 = por %p44, %p45
      %p47 = scmp.ne.s32.totalorder %s33, %s34
      %p48 = scmp.eq.s32.totalorder %s26, 1
      %p49 = por %p47, %p48
      %p51 = scmp.ne.s32.totalorder %s34, %s50
      %p52 = scmp.eq.s32.totalorder %s26, 0
      %p53 = por %p51, %p52
      %s55 = sadd.s32 %s54, 1
      %p58 = scmp.eq.s32.totalorder %s20, 1
      %p59 = scmp.ne.s32.totalorder %s54, %s56
      %p60 = scmp.eq.s32.totalorder %s20, 0
      %p61 = por %p59, %p60
      %p62 = scmp.ne.s32.totalorder %s54, %s56
      %p63 = scmp.eq.s32.totalorder %s25, 1
      %p64 = por %p62, %p63
      %p65 = scmp.ne.s32.totalorder %s56, %s57
      %p66 = scmp.eq.s32.totalorder %s25, 0
      %p67 = por %p65, %p66
      %p68 = scmp.ne.s32.totalorder %s56, %s57
      %p69 = scmp.eq.s32.totalorder %s26, 1
      %p70 = por %p68, %p69
      %p72 = scmp.ne.s32.totalorder %s57, %s71
      %p73 = scmp.eq.s32.totalorder %s26, 0
      %p74 = por %p72, %p73
      %s75 = ssub.s32 %s20, %s27
      %p76 = scmp.eq.s32.totalorder %s75, 0
      %s78 = sadd.s32 %s77, 1
      %s79 = scalar_select %p76, %s77, %s78
      %p82 = pneg %p76
      %p83 = scmp.eq.s32.totalorder %s20, 1
      %p84 = por %p82, %p83
      %p85 = scmp.ne.s32.totalorder %s77, %s80
      %p86 = scmp.eq.s32.totalorder %s20, 0
      %p87 = por %p85, %p86
      %p88 = scmp.ne.s32.totalorder %s77, %s80
      %p89 = scmp.eq.s32.totalorder %s25, 1
      %p90 = por %p88, %p89
      %p91 = scmp.ne.s32.totalorder %s80, %s81
      %p92 = scmp.eq.s32.totalorder %s25, 0
      %p93 = por %p91, %p92
      %p94 = scmp.ne.s32.totalorder %s80, %s81
      %p95 = scmp.eq.s32.totalorder %s26, 1
      %p96 = por %p94, %p95
      %p98 = scmp.ne.s32.totalorder %s81, %s97
      %p99 = scmp.eq.s32.totalorder %s26, 0
      %p100 = por %p98, %p99
      %s101 = ssub.s32 %s20, %s27
      %p102 = scmp.eq.s32.totalorder %s101, 0
      %s104 = sadd.s32 %s103, 1
      %s105 = scalar_select %p102, %s103, %s104
      %p108 = pneg %p102
      %p109 = scmp.eq.s32.totalorder %s20, 1
      %p110 = por %p108, %p109
      %p111 = scmp.ne.s32.totalorder %s103, %s106
      %p112 = scmp.eq.s32.totalorder %s20, 0
      %p113 = por %p111, %p112
      %p114 = scmp.ne.s32.totalorder %s103, %s106
      %p115 = scmp.eq.s32.totalorder %s25, 1
      %p116 = por %p114, %p115
      %p117 = scmp.ne.s32.totalorder %s106, %s107
      %p118 = scmp.eq.s32.totalorder %s25, 0
      %p119 = por %p117, %p118
      %p120 = scmp.ne.s32.totalorder %s106, %s107
      %p121 = scmp.eq.s32.totalorder %s26, 1
      %p122 = por %p120, %p121
      %p124 = scmp.ne.s32.totalorder %s107, %s123
      %p125 = scmp.eq.s32.totalorder %s26, 0
      %p126 = por %p124, %p125
      %p127 = scmp.le.s32.totalorder 1, %s20
      %p128 = scmp.lt.s32.totalorder %s20, 3
      %p129 = pnand %p127, %p128
      %p130 = pneg %p129
      // Predicated region
      $region9: #{tpu_custom_call.1} parent=5 // pred_check
        _
      $region10: #{tpu_custom_call.1} parent=5 // pred_check_branch
        %132 = sbr.rel (%p129) target = $region12
      $region11: #{tpu_custom_call.1} parent=5 // pred_region
        %s133 = ssub.s32 %s20, 1
        // Predicated region
        $region13: #{tpu_custom_call.1} parent=11 // pred_check
          %p134 = pneg %p67
        $region14: #{tpu_custom_call.1} parent=11 // pred_check_branch
          %136 = sbr.rel (%p134) target = $region16
        $region15: #{tpu_custom_call.1} parent=11 // pred_region
          %s138 = ssub.s32 2048, 2048
          %139 = vsyncadd [#allocation6], %s138
          %s140 = sshll.u32 [#allocation5], 4
          %s141 = int_to_ptr.vmem [resolvable:$true] %s140
          %146 = dma.hbm_to_vmem [thread:$0]  %s1, 2048, %s141, [#allocation6], 128, 128, 8
        $region16: #{tpu_custom_call.1} parent=11 // pred_fallthru
          _
      $region12: #{tpu_custom_call.1} parent=5 // pred_fallthru
        _
      %p147 = scmp.lt.s32.totalorder %s20, 2
      // Predicated region
      $region17: #{tpu_custom_call.1} parent=5 // pred_check
        %p148 = pneg %p147
      $region18: #{tpu_custom_call.1} parent=5 // pred_check_branch
        %150 = sbr.rel (%p148) target = $region20
      $region19: #{tpu_custom_call.1} parent=5 // pred_region
        // Predicated region
        $region21: #{tpu_custom_call.1} parent=19 // pred_check
          %p151 = pneg %p40
        $region22: #{tpu_custom_call.1} parent=19 // pred_check_branch
          %153 = sbr.rel (%p151) target = $region24
        $region23: #{tpu_custom_call.1} parent=19 // pred_region
          %s154 = sand.u32 %s30, 1
          %s155 = scalar_lea.sflag [#allocation3], %s154
          %s156 = sand.u32 %s30, 1
          %s157 = smul.addr %s156, 512
          %s158 = scalar_lea.vmem [#allocation2], %s157
          %s159 = smul.u32 64, %s20
          %s161 = ssub.s32 8192, 8192
          %162 = vsyncadd %s155, %s161
          %s163 = smul.addr %s159, 128
          %s164 = scalar_lea.hbm %s0, %s163
          %s165 = sshll.u32 %s158, 4
          %s166 = int_to_ptr.vmem [resolvable:$true] %s165
          %171 = dma.hbm_to_vmem [thread:$0]  %s164, 8192, %s166, %s155, 128, 128, 8
        $region24: #{tpu_custom_call.1} parent=19 // pred_fallthru
          _
      $region20: #{tpu_custom_call.1} parent=5 // pred_fallthru
        _
      %p172 = scmp.le.s32.totalorder 1, %s20
      %p173 = scmp.lt.s32.totalorder %s20, 3
      %p174 = pnand %p172, %p173
      %p175 = pneg %p174
      // Predicated region
      $region25: #{tpu_custom_call.1} parent=5 // pred_check
        _
      $region26: #{tpu_custom_call.1} parent=5 // pred_check_branch
        %177 = sbr.rel (%p174) target = $region28
      $region27: #{tpu_custom_call.1} parent=5 // pred_region
        %s178 = ssub.s32 %s20, 1
        %s179 = sand.u32 %s33, 1
        %s180 = scalar_lea.sflag [#allocation3], %s179
        %s181 = sand.u32 %s33, 1
        %s182 = smul.addr %s181, 512
        %s183 = scalar_lea.vmem [#allocation2], %s182
        // Predicated region
        $region29: #{tpu_custom_call.1} parent=27 // pred_check
          %p184 = pneg %p46
        $region30: #{tpu_custom_call.1} parent=27 // pred_check_branch
          %186 = sbr.rel (%p184) target = $region32
        $region31: #{tpu_custom_call.1} parent=27 // pred_region
          %187 = dma.done %s180, 8192
        $region32: #{tpu_custom_call.1} parent=27 // pred_fallthru
          _
        // Predicated region
        $region33: #{tpu_custom_call.1} parent=27 // pred_check
          %p188 = pneg %p67
        $region34: #{tpu_custom_call.1} parent=27 // pred_check_branch
          %190 = sbr.rel (%p188) target = $region36
        $region35: #{tpu_custom_call.1} parent=27 // pred_region
          %191 = dma.done [#allocation6], 2048
        $region36: #{tpu_custom_call.1} parent=27 // pred_fallthru
          _
        %s192 = sand.u32 %s33, 1
        %s193 = scalar_lea.sflag [#allocation3], %s192
        %s194 = sand.u32 %s33, 1
        %s195 = smul.addr %s194, 512
        %s196 = scalar_lea.vmem [#allocation2], %s195
        %p197 = pneg %p46
        %p198 = pneg %p43
        %p199 = pneg %p67
        %p200 = pneg %p64
        %p201 = pneg %p93
        %p202 = pneg %p90
        %s203 = sand.u32 %s80, 1
        %s204 = scalar_lea.sflag [#allocation4], %s203
        %s205 = sand.u32 %s80, 1
        %s206 = smul.addr %s205, 512
        %s207 = scalar_lea.vmem [#allocation7], %s206
        %p208 = pneg %p119
        %p209 = pneg %p116
        %s210 = sand.u32 %s106, 1
        %s211 = scalar_lea.sflag [#allocation9], %s210
        %s212 = sand.u32 %s106, 1
        %s213 = smul.addr %s212, 2
        %s214 = scalar_lea.vmem [#allocation8], %s213
        %s215 = smul.u32 64, %s25
        %s216 = smul.u32 64, %s25
        %v217 = vld [vmem:[%s183] sm:$0xff]
        %v218 = vld [vmem:[%s183 + $0x8] sm:$0xff]
        %v219 = vld [vmem:[%s183 + $0x10] sm:$0xff]
        %v220 = vld [vmem:[%s183 + $0x18] sm:$0xff]
        %v221 = vld [vmem:[%s183 + $0x20] sm:$0xff]
        %v222 = vld [vmem:[%s183 + $0x28] sm:$0xff]
        %v223 = vld [vmem:[%s183 + $0x30] sm:$0xff]
        %v224 = vld [vmem:[%s183 + $0x38] sm:$0xff]
        %v225 = vld [vmem:[%s183 + $0x40] sm:$0xff]
        %v226 = vld [vmem:[%s183 + $0x48] sm:$0xff]
        %v227 = vld [vmem:[%s183 + $0x50] sm:$0xff]
        %v228 = vld [vmem:[%s183 + $0x58] sm:$0xff]
        %v229 = vld [vmem:[%s183 + $0x60] sm:$0xff]
        %v230 = vld [vmem:[%s183 + $0x68] sm:$0xff]
        %v231 = vld [vmem:[%s183 + $0x70] sm:$0xff]
        %v232 = vld [vmem:[%s183 + $0x78] sm:$0xff]
        %v233 = vld [vmem:[%s183 + $0x80] sm:$0xff]
        %v234 = vld [vmem:[%s183 + $0x88] sm:$0xff]
        %v235 = vld [vmem:[%s183 + $0x90] sm:$0xff]
        %v236 = vld [vmem:[%s183 + $0x98] sm:$0xff]
        %v237 = vld [vmem:[%s183 + $0xa0] sm:$0xff]
        %v238 = vld [vmem:[%s183 + $0xa8] sm:$0xff]
        %v239 = vld [vmem:[%s183 + $0xb0] sm:$0xff]
        %v240 = vld [vmem:[%s183 + $0xb8] sm:$0xff]
        %v241 = vld [vmem:[%s183 + $0xc0] sm:$0xff]
        %v242 = vld [vmem:[%s183 + $0xc8] sm:$0xff]
        %v243 = vld [vmem:[%s183 + $0xd0] sm:$0xff]
        %v244 = vld [vmem:[%s183 + $0xd8] sm:$0xff]
        %v245 = vld [vmem:[%s183 + $0xe0] sm:$0xff]
        %v246 = vld [vmem:[%s183 + $0xe8] sm:$0xff]
        %v247 = vld [vmem:[%s183 + $0xf0] sm:$0xff]
        %v248 = vld [vmem:[%s183 + $0xf8] sm:$0xff]
        %v249 = vld [vmem:[%s183 + $0x100] sm:$0xff]
        %v250 = vld [vmem:[%s183 + $0x108] sm:$0xff]
        %v251 = vld [vmem:[%s183 + $0x110] sm:$0xff]
        %v252 = vld [vmem:[%s183 + $0x118] sm:$0xff]
        %v253 = vld [vmem:[%s183 + $0x120] sm:$0xff]
        %v254 = vld [vmem:[%s183 + $0x128] sm:$0xff]
        %v255 = vld [vmem:[%s183 + $0x130] sm:$0xff]
        %v256 = vld [vmem:[%s183 + $0x138] sm:$0xff]
        %v257 = vld [vmem:[%s183 + $0x140] sm:$0xff]
        %v258 = vld [vmem:[%s183 + $0x148] sm:$0xff]
        %v259 = vld [vmem:[%s183 + $0x150] sm:$0xff]
        %v260 = vld [vmem:[%s183 + $0x158] sm:$0xff]
        %v261 = vld [vmem:[%s183 + $0x160] sm:$0xff]
        %v262 = vld [vmem:[%s183 + $0x168] sm:$0xff]
        %v263 = vld [vmem:[%s183 + $0x170] sm:$0xff]
        %v264 = vld [vmem:[%s183 + $0x178] sm:$0xff]
        %v265 = vld [vmem:[%s183 + $0x180] sm:$0xff]
        %v266 = vld [vmem:[%s183 + $0x188] sm:$0xff]
        %v267 = vld [vmem:[%s183 + $0x190] sm:$0xff]
        %v268 = vld [vmem:[%s183 + $0x198] sm:$0xff]
        %v269 = vld [vmem:[%s183 + $0x1a0] sm:$0xff]
        %v270 = vld [vmem:[%s183 + $0x1a8] sm:$0xff]
        %v271 = vld [vmem:[%s183 + $0x1b0] sm:$0xff]
        %v272 = vld [vmem:[%s183 + $0x1b8] sm:$0xff]
        %v273 = vld [vmem:[%s183 + $0x1c0] sm:$0xff]
        %v274 = vld [vmem:[%s183 + $0x1c8] sm:$0xff]
        %v275 = vld [vmem:[%s183 + $0x1d0] sm:$0xff]
        %v276 = vld [vmem:[%s183 + $0x1d8] sm:$0xff]
        %v277 = vld [vmem:[%s183 + $0x1e0] sm:$0xff]
        %v278 = vld [vmem:[%s183 + $0x1e8] sm:$0xff]
        %v279 = vld [vmem:[%s183 + $0x1f0] sm:$0xff]
        %v280 = vld [vmem:[%s183 + $0x1f8] sm:$0xff]
        %v281 = vld [vmem:[#allocation5] sm:$0xff]
        %v282 = vld [vmem:[#allocation5 + $0x8] sm:$0xff]
        %v283 = vld [vmem:[#allocation5 + $0x10] sm:$0xff]
        %v284 = vld [vmem:[#allocation5 + $0x18] sm:$0xff]
        %v285 = vld [vmem:[#allocation5 + $0x20] sm:$0xff]
        %v286 = vld [vmem:[#allocation5 + $0x28] sm:$0xff]
        %v287 = vld [vmem:[#allocation5 + $0x30] sm:$0xff]
        %v288 = vld [vmem:[#allocation5 + $0x38] sm:$0xff]
        %v289 = vld [vmem:[#allocation5 + $0x40] sm:$0xff]
        %v290 = vld [vmem:[#allocation5 + $0x48] sm:$0xff]
        %v291 = vld [vmem:[#allocation5 + $0x50] sm:$0xff]
        %v292 = vld [vmem:[#allocation5 + $0x58] sm:$0xff]
        %v293 = vld [vmem:[#allocation5 + $0x60] sm:$0xff]
        %v294 = vld [vmem:[#allocation5 + $0x68] sm:$0xff]
        %v295 = vld [vmem:[#allocation5 + $0x70] sm:$0xff]
        %v296 = vld [vmem:[#allocation5 + $0x78] sm:$0xff]
        %297 = vmatprep.subr.mxu0 0.0
        %298 = vmatpush1.msra.mxu0 %v281
        %299 = vmatprep.subr.mxu0 0.0
        %300 = vmatpush1.msra.mxu0 %v282
        %301 = vmatprep.subr.mxu0 0.0
        %302 = vmatpush1.msra.mxu0 %v283
        %303 = vmatprep.subr.mxu0 0.0
        %304 = vmatpush1.msra.mxu0 %v284
        %305 = vmatprep.subr.mxu0 0.0
        %306 = vmatpush1.msra.mxu0 %v285
        %307 = vmatprep.subr.mxu0 0.0
        %308 = vmatpush1.msra.mxu0 %v286
        %309 = vmatprep.subr.mxu0 0.0
        %310 = vmatpush1.msra.mxu0 %v287
        %311 = vmatprep.subr.mxu0 0.0
        %312 = vmatpush1.msra.mxu0 %v288
        %313 = vmatprep.subr.mxu0 0.0
        %314 = vmatpush1.msra.mxu0 %v289
        %315 = vmatprep.subr.mxu0 0.0
        %316 = vmatpush1.msra.mxu0 %v290
        %317 = vmatprep.subr.mxu0 0.0
        %318 = vmatpush1.msra.mxu0 %v291
        %319 = vmatprep.subr.mxu0 0.0
        %320 = vmatpush1.msra.mxu0 %v292
        %321 = vmatprep.subr.mxu0 0.0
        %322 = vmatpush1.msra.mxu0 %v293
        %323 = vmatprep.subr.mxu0 0.0
        %324 = vmatpush1.msra.mxu0 %v294
        %325 = vmatprep.subr.mxu0 0.0
        %326 = vmatpush1.msra.mxu0 %v295
        %327 = vmatprep.subr.mxu0 0.0
        %328 = vmatpush1.msra.mxu0 %v296
        %329 = vmatprep.subr.mxu0 0.0
        %330 = vmatpush1.msra.mxu0 0.0
        %331 = vmatprep.subr.mxu0 0.0
        %332 = vmatpush1.msra.mxu0 0.0
        %333 = vmatprep.subr.mxu0 0.0
        %334 = vmatpush1.msra.mxu0 0.0
        %335 = vmatprep.subr.mxu0 0.0
        %336 = vmatpush1.msra.mxu0 0.0
        %337 = vmatprep.subr.mxu0 0.0
        %338 = vmatpush1.msra.mxu0 0.0
        %339 = vmatprep.subr.mxu0 0.0
        %340 = vmatpush1.msra.mxu0 0.0
        %341 = vmatprep.subr.mxu0 0.0
        %342 = vmatpush1.msra.mxu0 0.0
        %343 = vmatprep.subr.mxu0 0.0
        %344 = vmatpush1.msra.mxu0 0.0
        %345 = vmatprep.subr.mxu0 0.0
        %346 = vmatpush1.msra.mxu0 0.0
        %347 = vmatprep.subr.mxu0 0.0
        %348 = vmatpush1.msra.mxu0 0.0
        %349 = vmatprep.subr.mxu0 0.0
        %350 = vmatpush1.msra.mxu0 0.0
        %351 = vmatprep.subr.mxu0 0.0
        %352 = vmatpush1.msra.mxu0 0.0
        %353 = vmatprep.subr.mxu0 0.0
        %354 = vmatpush1.msra.mxu0 0.0
        %355 = vmatprep.subr.mxu0 0.0
        %356 = vmatpush1.msra.mxu0 0.0
        %357 = vmatprep.subr.mxu0 0.0
        %358 = vmatpush1.msra.mxu0 0.0
        %359 = vmatprep.subr.mxu0 0.0
        %360 = vmatpush1.msra.mxu0 0.0
        %361 = vmatprep.mubr.f32.mxu0 0.0
        %362 = vmatmul.mubr.f32.gmra.mrb[0].mxu0 %v217
        %v363 = vpop.f32.mrb[0].mxu0
        %v364 = vadd.f32 0.0, %v363
        %v365 = vpop.f32.mrb[0].mxu0
        %366 = vmatprep.mubr.f32.mxu0 0.0
        %367 = vmatmul.mubr.f32.gmra.mrb[0].mxu0 %v218
        %v368 = vpop.f32.mrb[0].mxu0
        %v369 = vadd.f32 0.0, %v368
        %v370 = vpop.f32.mrb[0].mxu0
        %371 = vmatprep.mubr.f32.mxu0 0.0
        %372 = vmatmul.mubr.f32.gmra.mrb[0].mxu0 %v219
        %v373 = vpop.f32.mrb[0].mxu0
        %v374 = vadd.f32 0.0, %v373
        %v375 = vpop.f32.mrb[0].mxu0
        %376 = vmatprep.mubr.f32.mxu0 0.0
        %377 = vmatmul.mubr.f32.gmra.mrb[0].mxu0 %v220
        %v378 = vpop.f32.mrb[0].mxu0
        %v379 = vadd.f32 0.0, %v378
        %v380 = vpop.f32.mrb[0].mxu0
        %381 = vmatprep.mubr.f32.mxu0 0.0
        %382 = vmatmul.mubr.f32.gmra.mrb[0].mxu0 %v221
        %v383 = vpop.f32.mrb[0].mxu0
        %v384 = vadd.f32 0.0, %v383
        %v385 = vpop.f32.mrb[0].mxu0
        %386 = vmatprep.mubr.f32.mxu0 0.0
        %387 = vmatmul.mubr.f32.gmra.mrb[0].mxu0 %v222
        %v388 = vpop.f32.mrb[0].mxu0
        %v389 = vadd.f32 0.0, %v388
        %v390 = vpop.f32.mrb[0].mxu0
        %391 = vmatprep.mubr.f32.mxu0 0.0
        %392 = vmatmul.mubr.f32.gmra.mrb[0].mxu0 %v223
        %v393 = vpop.f32.mrb[0].mxu0
        %v394 = vadd.f32 0.0, %v393
        %v395 = vpop.f32.mrb[0].mxu0
        %396 = vmatprep.mubr.f32.mxu0 0.0
        %397 = vmatmul.mubr.f32.gmra.mrb[0].mxu0 %v224
        %v398 = vpop.f32.mrb[0].mxu0
        %v399 = vadd.f32 0.0, %v398
        %v400 = vpop.f32.mrb[0].mxu0
        %401 = vmatprep.mubr.f32.mxu0 0.0
        %402 = vmatmul.mubr.f32.gmra.mrb[0].mxu0 %v225
        %v403 = vpop.f32.mrb[0].mxu0
        %v404 = vadd.f32 0.0, %v403
        %v405 = vpop.f32.mrb[0].mxu0
        %406 = vmatprep.mubr.f32.mxu0 0.0
        %407 = vmatmul.mubr.f32.gmra.mrb[0].mxu0 %v226
        %v408 = vpop.f32.mrb[0].mxu0
        %v409 = vadd.f32 0.0, %v408
        %v410 = vpop.f32.mrb[0].mxu0
        %411 = vmatprep.mubr.f32.mxu0 0.0
        %412 = vmatmul.mubr.f32.gmra.mrb[0].mxu0 %v227
        %v413 = vpop.f32.mrb[0].mxu0
        %v414 = vadd.f32 0.0, %v413
        %v415 = vpop.f32.mrb[0].mxu0
        %416 = vmatprep.mubr.f32.mxu0 0.0
        %417 = vmatmul.mubr.f32.gmra.mrb[0].mxu0 %v228
        %v418 = vpop.f32.mrb[0].mxu0
        %v419 = vadd.f32 0.0, %v418
        %v420 = vpop.f32.mrb[0].mxu0
        %421 = vmatprep.mubr.f32.mxu0 0.0
        %422 = vmatmul.mubr.f32.gmra.mrb[0].mxu0 %v229
        %v423 = vpop.f32.mrb[0].mxu0
        %v424 = vadd.f32 0.0, %v423
        %v425 = vpop.f32.mrb[0].mxu0
        %426 = vmatprep.mubr.f32.mxu0 0.0
        %427 = vmatmul.mubr.f32.gmra.mrb[0].mxu0 %v230
        %v428 = vpop.f32.mrb[0].mxu0
        %v429 = vadd.f32 0.0, %v428
        %v430 = vpop.f32.mrb[0].mxu0
        %431 = vmatprep.mubr.f32.mxu0 0.0
        %432 = vmatmul.mubr.f32.gmra.mrb[0].mxu0 %v231
        %v433 = vpop.f32.mrb[0].mxu0
        %v434 = vadd.f32 0.0, %v433
        %v435 = vpop.f32.mrb[0].mxu0
        %436 = vmatprep.mubr.f32.mxu0 0.0
        %437 = vmatmul.mubr.f32.gmra.mrb[0].mxu0 %v232
        %v438 = vpop.f32.mrb[0].mxu0
        %v439 = vadd.f32 0.0, %v438
        %v440 = vpop.f32.mrb[0].mxu0
        %441 = vmatprep.mubr.f32.mxu0 0.0
        %442 = vmatmul.mubr.f32.gmra.mrb[0].mxu0 %v233
        %v443 = vpop.f32.mrb[0].mxu0
        %v444 = vadd.f32 0.0, %v443
        %v445 = vpop.f32.mrb[0].mxu0
        %446 = vmatprep.mubr.f32.mxu0 0.0
        %447 = vmatmul.mubr.f32.gmra.mrb[0].mxu0 %v234
        %v448 = vpop.f32.mrb[0].mxu0
        %v449 = vadd.f32 0.0, %v448
        %v450 = vpop.f32.mrb[0].mxu0
        %451 = vmatprep.mubr.f32.mxu0 0.0
        %452 = vmatmul.mubr.f32.gmra.mrb[0].mxu0 %v235
        %v453 = vpop.f32.mrb[0].mxu0
        %v454 = vadd.f32 0.0, %v453
        %v455 = vpop.f32.mrb[0].mxu0
        %456 = vmatprep.mubr.f32.mxu0 0.0
        %457 = vmatmul.mubr.f32.gmra.mrb[0].mxu0 %v236
        %v458 = vpop.f32.mrb[0].mxu0
        %v459 = vadd.f32 0.0, %v458
        %v460 = vpop.f32.mrb[0].mxu0
        %461 = vmatprep.mubr.f32.mxu0 0.0
        %462 = vmatmul.mubr.f32.gmra.mrb[0].mxu0 %v237
        %v463 = vpop.f32.mrb[0].mxu0
        %v464 = vadd.f32 0.0, %v463
        %v465 = vpop.f32.mrb[0].mxu0
        %466 = vmatprep.mubr.f32.mxu0 0.0
        %467 = vmatmul.mubr.f32.gmra.mrb[0].mxu0 %v238
        %v468 = vpop.f32.mrb[0].mxu0
        %v469 = vadd.f32 0.0, %v468
        %v470 = vpop.f32.mrb[0].mxu0
        %471 = vmatprep.mubr.f32.mxu0 0.0
        %472 = vmatmul.mubr.f32.gmra.mrb[0].mxu0 %v239
        %v473 = vpop.f32.mrb[0].mxu0
        %v474 = vadd.f32 0.0, %v473
        %v475 = vpop.f32.mrb[0].mxu0
        %476 = vmatprep.mubr.f32.mxu0 0.0
        %477 = vmatmul.mubr.f32.gmra.mrb[0].mxu0 %v240
        %v478 = vpop.f32.mrb[0].mxu0
        %v479 = vadd.f32 0.0, %v478
        %v480 = vpop.f32.mrb[0].mxu0
        %481 = vmatprep.mubr.f32.mxu0 0.0
        %482 = vmatmul.mubr.f32.gmra.mrb[0].mxu0 %v241
        %v483 = vpop.f32.mrb[0].mxu0
        %v484 = vadd.f32 0.0, %v483
        %v485 = vpop.f32.mrb[0].mxu0
        %486 = vmatprep.mubr.f32.mxu0 0.0
        %487 = vmatmul.mubr.f32.gmra.mrb[0].mxu0 %v242
        %v488 = vpop.f32.mrb[0].mxu0
        %v489 = vadd.f32 0.0, %v488
        %v490 = vpop.f32.mrb[0].mxu0
        %491 = vmatprep.mubr.f32.mxu0 0.0
        %492 = vmatmul.mubr.f32.gmra.mrb[0].mxu0 %v243
        %v493 = vpop.f32.mrb[0].mxu0
        %v494 = vadd.f32 0.0, %v493
        %v495 = vpop.f32.mrb[0].mxu0
        %496 = vmatprep.mubr.f32.mxu0 0.0
        %497 = vmatmul.mubr.f32.gmra.mrb[0].mxu0 %v244
        %v498 = vpop.f32.mrb[0].mxu0
        %v499 = vadd.f32 0.0, %v498
        %v500 = vpop.f32.mrb[0].mxu0
        %501 = vmatprep.mubr.f32.mxu0 0.0
        %502 = vmatmul.mubr.f32.gmra.mrb[0].mxu0 %v245
        %v503 = vpop.f32.mrb[0].mxu0
        %v504 = vadd.f32 0.0, %v503
        %v505 = vpop.f32.mrb[0].mxu0
        %506 = vmatprep.mubr.f32.mxu0 0.0
        %507 = vmatmul.mubr.f32.gmra.mrb[0].mxu0 %v246
        %v508 = vpop.f32.mrb[0].mxu0
        %v509 = vadd.f32 0.0, %v508
        %v510 = vpop.f32.mrb[0].mxu0
        %511 = vmatprep.mubr.f32.mxu0 0.0
        %512 = vmatmul.mubr.f32.gmra.mrb[0].mxu0 %v247
        %v513 = vpop.f32.mrb[0].mxu0
        %v514 = vadd.f32 0.0, %v513
        %v515 = vpop.f32.mrb[0].mxu0
        %516 = vmatprep.mubr.f32.mxu0 0.0
        %517 = vmatmul.mubr.f32.gmra.mrb[0].mxu0 %v248
        %v518 = vpop.f32.mrb[0].mxu0
        %v519 = vadd.f32 0.0, %v518
        %v520 = vpop.f32.mrb[0].mxu0
        %521 = vmatprep.mubr.f32.mxu0 0.0
        %522 = vmatmul.mubr.f32.gmra.mrb[0].mxu0 %v249
        %v523 = vpop.f32.mrb[0].mxu0
        %v524 = vadd.f32 0.0, %v523
        %v525 = vpop.f32.mrb[0].mxu0
        %526 = vmatprep.mubr.f32.mxu0 0.0
        %527 = vmatmul.mubr.f32.gmra.mrb[0].mxu0 %v250
        %v528 = vpop.f32.mrb[0].mxu0
        %v529 = vadd.f32 0.0, %v528
        %v530 = vpop.f32.mrb[0].mxu0
        %531 = vmatprep.mubr.f32.mxu0 0.0
        %532 = vmatmul.mubr.f32.gmra.mrb[0].mxu0 %v251
        %v533 = vpop.f32.mrb[0].mxu0
        %v534 = vadd.f32 0.0, %v533
        %v535 = vpop.f32.mrb[0].mxu0
        %536 = vmatprep.mubr.f32.mxu0 0.0
        %537 = vmatmul.mubr.f32.gmra.mrb[0].mxu0 %v252
        %v538 = vpop.f32.mrb[0].mxu0
        %v539 = vadd.f32 0.0, %v538
        %v540 = vpop.f32.mrb[0].mxu0
        %541 = vmatprep.mubr.f32.mxu0 0.0
        %542 = vmatmul.mubr.f32.gmra.mrb[0].mxu0 %v253
        %v543 = vpop.f32.mrb[0].mxu0
        %v544 = vadd.f32 0.0, %v543
        %v545 = vpop.f32.mrb[0].mxu0
        %546 = vmatprep.mubr.f32.mxu0 0.0
        %547 = vmatmul.mubr.f32.gmra.mrb[0].mxu0 %v254
        %v548 = vpop.f32.mrb[0].mxu0
        %v549 = vadd.f32 0.0, %v548
        %v550 = vpop.f32.mrb[0].mxu0
        %551 = vmatprep.mubr.f32.mxu0 0.0
        %552 = vmatmul.mubr.f32.gmra.mrb[0].mxu0 %v255
        %v553 = vpop.f32.mrb[0].mxu0
        %v554 = vadd.f32 0.0, %v553
        %v555 = vpop.f32.mrb[0].mxu0
        %556 = vmatprep.mubr.f32.mxu0 0.0
        %557 = vmatmul.mubr.f32.gmra.mrb[0].mxu0 %v256
        %v558 = vpop.f32.mrb[0].mxu0
        %v559 = vadd.f32 0.0, %v558
        %v560 = vpop.f32.mrb[0].mxu0
        %561 = vmatprep.mubr.f32.mxu0 0.0
        %562 = vmatmul.mubr.f32.gmra.mrb[0].mxu0 %v257
        %v563 = vpop.f32.mrb[0].mxu0
        %v564 = vadd.f32 0.0, %v563
        %v565 = vpop.f32.mrb[0].mxu0
        %566 = vmatprep.mubr.f32.mxu0 0.0
        %567 = vmatmul.mubr.f32.gmra.mrb[0].mxu0 %v258
        %v568 = vpop.f32.mrb[0].mxu0
        %v569 = vadd.f32 0.0, %v568
        %v570 = vpop.f32.mrb[0].mxu0
        %571 = vmatprep.mubr.f32.mxu0 0.0
        %572 = vmatmul.mubr.f32.gmra.mrb[0].mxu0 %v259
        %v573 = vpop.f32.mrb[0].mxu0
        %v574 = vadd.f32 0.0, %v573
        %v575 = vpop.f32.mrb[0].mxu0
        %576 = vmatprep.mubr.f32.mxu0 0.0
        %577 = vmatmul.mubr.f32.gmra.mrb[0].mxu0 %v260
        %v578 = vpop.f32.mrb[0].mxu0
        %v579 = vadd.f32 0.0, %v578
        %v580 = vpop.f32.mrb[0].mxu0
        %581 = vmatprep.mubr.f32.mxu0 0.0
        %582 = vmatmul.mubr.f32.gmra.mrb[0].mxu0 %v261
        %v583 = vpop.f32.mrb[0].mxu0
        %v584 = vadd.f32 0.0, %v583
        %v585 = vpop.f32.mrb[0].mxu0
        %586 = vmatprep.mubr.f32.mxu0 0.0
        %587 = vmatmul.mubr.f32.gmra.mrb[0].mxu0 %v262
        %v588 = vpop.f32.mrb[0].mxu0
        %v589 = vadd.f32 0.0, %v588
        %v590 = vpop.f32.mrb[0].mxu0
        %591 = vmatprep.mubr.f32.mxu0 0.0
        %592 = vmatmul.mubr.f32.gmra.mrb[0].mxu0 %v263
        %v593 = vpop.f32.mrb[0].mxu0
        %v594 = vadd.f32 0.0, %v593
        %v595 = vpop.f32.mrb[0].mxu0
        %596 = vmatprep.mubr.f32.mxu0 0.0
        %597 = vmatmul.mubr.f32.gmra.mrb[0].mxu0 %v264
        %v598 = vpop.f32.mrb[0].mxu0
        %v599 = vadd.f32 0.0, %v598
        %v600 = vpop.f32.mrb[0].mxu0
        %601 = vmatprep.mubr.f32.mxu0 0.0
        %602 = vmatmul.mubr.f32.gmra.mrb[0].mxu0 %v265
        %v603 = vpop.f32.mrb[0].mxu0
        %v604 = vadd.f32 0.0, %v603
        %v605 = vpop.f32.mrb[0].mxu0
        %606 = vmatprep.mubr.f32.mxu0 0.0
        %607 = vmatmul.mubr.f32.gmra.mrb[0].mxu0 %v266
        %v608 = vpop.f32.mrb[0].mxu0
        %v609 = vadd.f32 0.0, %v608
        %v610 = vpop.f32.mrb[0].mxu0
        %611 = vmatprep.mubr.f32.mxu0 0.0
        %612 = vmatmul.mubr.f32.gmra.mrb[0].mxu0 %v267
        %v613 = vpop.f32.mrb[0].mxu0
        %v614 = vadd.f32 0.0, %v613
        %v615 = vpop.f32.mrb[0].mxu0
        %616 = vmatprep.mubr.f32.mxu0 0.0
        %617 = vmatmul.mubr.f32.gmra.mrb[0].mxu0 %v268
        %v618 = vpop.f32.mrb[0].mxu0
        %v619 = vadd.f32 0.0, %v618
        %v620 = vpop.f32.mrb[0].mxu0
        %621 = vmatprep.mubr.f32.mxu0 0.0
        %622 = vmatmul.mubr.f32.gmra.mrb[0].mxu0 %v269
        %v623 = vpop.f32.mrb[0].mxu0
        %v624 = vadd.f32 0.0, %v623
        %v625 = vpop.f32.mrb[0].mxu0
        %626 = vmatprep.mubr.f32.mxu0 0.0
        %627 = vmatmul.mubr.f32.gmra.mrb[0].mxu0 %v270
        %v628 = vpop.f32.mrb[0].mxu0
        %v629 = vadd.f32 0.0, %v628
        %v630 = vpop.f32.mrb[0].mxu0
        %631 = vmatprep.mubr.f32.mxu0 0.0
        %632 = vmatmul.mubr.f32.gmra.mrb[0].mxu0 %v271
        %v633 = vpop.f32.mrb[0].mxu0
        %v634 = vadd.f32 0.0, %v633
        %v635 = vpop.f32.mrb[0].mxu0
        %636 = vmatprep.mubr.f32.mxu0 0.0
        %637 = vmatmul.mubr.f32.gmra.mrb[0].mxu0 %v272
        %v638 = vpop.f32.mrb[0].mxu0
        %v639 = vadd.f32 0.0, %v638
        %v640 = vpop.f32.mrb[0].mxu0
        %641 = vmatprep.mubr.f32.mxu0 0.0
        %642 = vmatmul.mubr.f32.gmra.mrb[0].mxu0 %v273
        %v643 = vpop.f32.mrb[0].mxu0
        %v644 = vadd.f32 0.0, %v643
        %v645 = vpop.f32.mrb[0].mxu0
        %646 = vmatprep.mubr.f32.mxu0 0.0
        %647 = vmatmul.mubr.f32.gmra.mrb[0].mxu0 %v274
        %v648 = vpop.f32.mrb[0].mxu0
        %v649 = vadd.f32 0.0, %v648
        %v650 = vpop.f32.mrb[0].mxu0
        %651 = vmatprep.mubr.f32.mxu0 0.0
        %652 = vmatmul.mubr.f32.gmra.mrb[0].mxu0 %v275
        %v653 = vpop.f32.mrb[0].mxu0
        %v654 = vadd.f32 0.0, %v653
        %v655 = vpop.f32.mrb[0].mxu0
        %656 = vmatprep.mubr.f32.mxu0 0.0
        %657 = vmatmul.mubr.f32.gmra.mrb[0].mxu0 %v276
        %v658 = vpop.f32.mrb[0].mxu0
        %v659 = vadd.f32 0.0, %v658
        %v660 = vpop.f32.mrb[0].mxu0
        %661 = vmatprep.mubr.f32.mxu0 0.0
        %662 = vmatmul.mubr.f32.gmra.mrb[0].mxu0 %v277
        %v663 = vpop.f32.mrb[0].mxu0
        %v664 = vadd.f32 0.0, %v663
        %v665 = vpop.f32.mrb[0].mxu0
        %666 = vmatprep.mubr.f32.mxu0 0.0
        %667 = vmatmul.mubr.f32.gmra.mrb[0].mxu0 %v278
        %v668 = vpop.f32.mrb[0].mxu0
        %v669 = vadd.f32 0.0, %v668
        %v670 = vpop.f32.mrb[0].mxu0
        %671 = vmatprep.mubr.f32.mxu0 0.0
        %672 = vmatmul.mubr.f32.gmra.mrb[0].mxu0 %v279
        %v673 = vpop.f32.mrb[0].mxu0
        %v674 = vadd.f32 0.0, %v673
        %v675 = vpop.f32.mrb[0].mxu0
        %676 = vmatprep.mubr.f32.mxu0 0.0
        %677 = vmatmul.mubr.f32.gmra.mrb[0].mxu0 %v280
        %v678 = vpop.f32.mrb[0].mxu0
        %v679 = vadd.f32 0.0, %v678
        %v680 = vpop.f32.mrb[0].mxu0
        %681 = vdwg.mxu0
        %682 = vst [vmem:[%s207] sm:$0xff] %v364
        %683 = vst [vmem:[%s207 + $0x8] sm:$0xff] %v369
        %684 = vst [vmem:[%s207 + $0x10] sm:$0xff] %v374
        %685 = vst [vmem:[%s207 + $0x18] sm:$0xff] %v379
        %686 = vst [vmem:[%s207 + $0x20] sm:$0xff] %v384
        %687 = vst [vmem:[%s207 + $0x28] sm:$0xff] %v389
        %688 = vst [vmem:[%s207 + $0x30] sm:$0xff] %v394
        %689 = vst [vmem:[%s207 + $0x38] sm:$0xff] %v399
        %690 = vst [vmem:[%s207 + $0x40] sm:$0xff] %v404
        %691 = vst [vmem:[%s207 + $0x48] sm:$0xff] %v409
        %692 = vst [vmem:[%s207 + $0x50] sm:$0xff] %v414
        %693 = vst [vmem:[%s207 + $0x58] sm:$0xff] %v419
        %694 = vst [vmem:[%s207 + $0x60] sm:$0xff] %v424
        %695 = vst [vmem:[%s207 + $0x68] sm:$0xff] %v429
        %696 = vst [vmem:[%s207 + $0x70] sm:$0xff] %v434
        %697 = vst [vmem:[%s207 + $0x78] sm:$0xff] %v439
        %698 = vst [vmem:[%s207 + $0x80] sm:$0xff] %v444
        %699 = vst [vmem:[%s207 + $0x88] sm:$0xff] %v449
        %700 = vst [vmem:[%s207 + $0x90] sm:$0xff] %v454
        %701 = vst [vmem:[%s207 + $0x98] sm:$0xff] %v459
        %702 = vst [vmem:[%s207 + $0xa0] sm:$0xff] %v464
        %703 = vst [vmem:[%s207 + $0xa8] sm:$0xff] %v469
        %704 = vst [vmem:[%s207 + $0xb0] sm:$0xff] %v474
        %705 = vst [vmem:[%s207 + $0xb8] sm:$0xff] %v479
        %706 = vst [vmem:[%s207 + $0xc0] sm:$0xff] %v484
        %707 = vst [vmem:[%s207 + $0xc8] sm:$0xff] %v489
        %708 = vst [vmem:[%s207 + $0xd0] sm:$0xff] %v494
        %709 = vst [vmem:[%s207 + $0xd8] sm:$0xff] %v499
        %710 = vst [vmem:[%s207 + $0xe0] sm:$0xff] %v504
        %711 = vst [vmem:[%s207 + $0xe8] sm:$0xff] %v509
        %712 = vst [vmem:[%s207 + $0xf0] sm:$0xff] %v514
        %713 = vst [vmem:[%s207 + $0xf8] sm:$0xff] %v519
        %714 = vst [vmem:[%s207 + $0x100] sm:$0xff] %v524
        %715 = vst [vmem:[%s207 + $0x108] sm:$0xff] %v529
        %716 = vst [vmem:[%s207 + $0x110] sm:$0xff] %v534
        %717 = vst [vmem:[%s207 + $0x118] sm:$0xff] %v539
        %718 = vst [vmem:[%s207 + $0x120] sm:$0xff] %v544
        %719 = vst [vmem:[%s207 + $0x128] sm:$0xff] %v549
        %720 = vst [vmem:[%s207 + $0x130] sm:$0xff] %v554
        %721 = vst [vmem:[%s207 + $0x138] sm:$0xff] %v559
        %722 = vst [vmem:[%s207 + $0x140] sm:$0xff] %v564
        %723 = vst [vmem:[%s207 + $0x148] sm:$0xff] %v569
        %724 = vst [vmem:[%s207 + $0x150] sm:$0xff] %v574
        %725 = vst [vmem:[%s207 + $0x158] sm:$0xff] %v579
        %726 = vst [vmem:[%s207 + $0x160] sm:$0xff] %v584
        %727 = vst [vmem:[%s207 + $0x168] sm:$0xff] %v589
        %728 = vst [vmem:[%s207 + $0x170] sm:$0xff] %v594
        %729 = vst [vmem:[%s207 + $0x178] sm:$0xff] %v599
        %730 = vst [vmem:[%s207 + $0x180] sm:$0xff] %v604
        %731 = vst [vmem:[%s207 + $0x188] sm:$0xff] %v609
        %732 = vst [vmem:[%s207 + $0x190] sm:$0xff] %v614
        %733 = vst [vmem:[%s207 + $0x198] sm:$0xff] %v619
        %734 = vst [vmem:[%s207 + $0x1a0] sm:$0xff] %v624
        %735 = vst [vmem:[%s207 + $0x1a8] sm:$0xff] %v629
        %736 = vst [vmem:[%s207 + $0x1b0] sm:$0xff] %v634
        %737 = vst [vmem:[%s207 + $0x1b8] sm:$0xff] %v639
        %738 = vst [vmem:[%s207 + $0x1c0] sm:$0xff] %v644
        %739 = vst [vmem:[%s207 + $0x1c8] sm:$0xff] %v649
        %740 = vst [vmem:[%s207 + $0x1d0] sm:$0xff] %v654
        %741 = vst [vmem:[%s207 + $0x1d8] sm:$0xff] %v659
        %742 = vst [vmem:[%s207 + $0x1e0] sm:$0xff] %v664
        %743 = vst [vmem:[%s207 + $0x1e8] sm:$0xff] %v669
        %744 = vst [vmem:[%s207 + $0x1f0] sm:$0xff] %v674
        %745 = vst [vmem:[%s207 + $0x1f8] sm:$0xff] %v679
        %v746 = vadd.f32 %v364, %v369
        %v747 = vadd.f32 %v746, %v374
        %v748 = vadd.f32 %v747, %v379
        %v749 = vadd.f32 %v748, %v384
        %v750 = vadd.f32 %v749, %v389
        %v751 = vadd.f32 %v750, %v394
        %v752 = vadd.f32 %v751, %v399
        %v753 = vadd.f32 %v752, %v404
        %v754 = vadd.f32 %v753, %v409
        %v755 = vadd.f32 %v754, %v414
        %v756 = vadd.f32 %v755, %v419
        %v757 = vadd.f32 %v756, %v424
        %v758 = vadd.f32 %v757, %v429
        %v759 = vadd.f32 %v758, %v434
        %v760 = vadd.f32 %v759, %v439
        %v761 = vadd.f32 %v760, %v444
        %v762 = vadd.f32 %v761, %v449
        %v763 = vadd.f32 %v762, %v454
        %v764 = vadd.f32 %v763, %v459
        %v765 = vadd.f32 %v764, %v464
        %v766 = vadd.f32 %v765, %v469
        %v767 = vadd.f32 %v766, %v474
        %v768 = vadd.f32 %v767, %v479
        %v769 = vadd.f32 %v768, %v484
        %v770 = vadd.f32 %v769, %v489
        %v771 = vadd.f32 %v770, %v494
        %v772 = vadd.f32 %v771, %v499
        %v773 = vadd.f32 %v772, %v504
        %v774 = vadd.f32 %v773, %v509
        %v775 = vadd.f32 %v774, %v514
        %v776 = vadd.f32 %v775, %v519
        %v777 = vadd.f32 %v776, %v524
        %v778 = vadd.f32 %v777, %v529
        %v779 = vadd.f32 %v778, %v534
        %v780 = vadd.f32 %v779, %v539
        %v781 = vadd.f32 %v780, %v544
        %v782 = vadd.f32 %v781, %v549
        %v783 = vadd.f32 %v782, %v554
        %v784 = vadd.f32 %v783, %v559
        %v785 = vadd.f32 %v784, %v564
        %v786 = vadd.f32 %v785, %v569
        %v787 = vadd.f32 %v786, %v574
        %v788 = vadd.f32 %v787, %v579
        %v789 = vadd.f32 %v788, %v584
        %v790 = vadd.f32 %v789, %v589
        %v791 = vadd.f32 %v790, %v594
        %v792 = vadd.f32 %v791, %v599
        %v793 = vadd.f32 %v792, %v604
        %v794 = vadd.f32 %v793, %v609
        %v795 = vadd.f32 %v794, %v614
        %v796 = vadd.f32 %v795, %v619
        %v797 = vadd.f32 %v796, %v624
        %v798 = vadd.f32 %v797, %v629
        %v799 = vadd.f32 %v798, %v634
        %v800 = vadd.f32 %v799, %v639
        %v801 = vadd.f32 %v800, %v644
        %v802 = vadd.f32 %v801, %v649
        %v803 = vadd.f32 %v802, %v654
        %v804 = vadd.f32 %v803, %v659
        %v805 = vadd.f32 %v804, %v664
        %v806 = vadd.f32 %v805, %v669
        %v807 = vadd.f32 %v806, %v674
        %v808 = vadd.f32 %v807, %v679
        %v809 = vrot.slane %v808, 4
        %v810 = vadd.f32 %v808, %v809
        %v811 = vrot.slane %v810, 2
        %v812 = vadd.f32 %v810, %v811
        %v813 = vrot.slane %v812, 1
        %v814 = vadd.f32 %v812, %v813
        %815 = vst [vmem:[%s214] sm:$0x1] %v814
        %v816 = vmul.f32 %v364, %v364
        %v817 = vmul.f32 %v369, %v369
        %v818 = vmul.f32 %v374, %v374
        %v819 = vmul.f32 %v379, %v379
        %v820 = vmul.f32 %v384, %v384
        %v821 = vmul.f32 %v389, %v389
        %v822 = vmul.f32 %v394, %v394
        %v823 = vmul.f32 %v399, %v399
        %v824 = vmul.f32 %v404, %v404
        %v825 = vmul.f32 %v409, %v409
        %v826 = vmul.f32 %v414, %v414
        %v827 = vmul.f32 %v419, %v419
        %v828 = vmul.f32 %v424, %v424
        %v829 = vmul.f32 %v429, %v429
        %v830 = vmul.f32 %v434, %v434
        %v831 = vmul.f32 %v439, %v439
        %v832 = vmul.f32 %v444, %v444
        %v833 = vmul.f32 %v449, %v449
        %v834 = vmul.f32 %v454, %v454
        %v835 = vmul.f32 %v459, %v459
        %v836 = vmul.f32 %v464, %v464
        %v837 = vmul.f32 %v469, %v469
        %v838 = vmul.f32 %v474, %v474
        %v839 = vmul.f32 %v479, %v479
        %v840 = vmul.f32 %v484, %v484
        %v841 = vmul.f32 %v489, %v489
        %v842 = vmul.f32 %v494, %v494
        %v843 = vmul.f32 %v499, %v499
        %v844 = vmul.f32 %v504, %v504
        %v845 = vmul.f32 %v509, %v509
        %v846 = vmul.f32 %v514, %v514
        %v847 = vmul.f32 %v519, %v519
        %v848 = vmul.f32 %v524, %v524
        %v849 = vmul.f32 %v529, %v529
        %v850 = vmul.f32 %v534, %v534
        %v851 = vmul.f32 %v539, %v539
        %v852 = vmul.f32 %v544, %v544
        %v853 = vmul.f32 %v549, %v549
        %v854 = vmul.f32 %v554, %v554
        %v855 = vmul.f32 %v559, %v559
        %v856 = vmul.f32 %v564, %v564
        %v857 = vmul.f32 %v569, %v569
        %v858 = vmul.f32 %v574, %v574
        %v859 = vmul.f32 %v579, %v579
        %v860 = vmul.f32 %v584, %v584
        %v861 = vmul.f32 %v589, %v589
        %v862 = vmul.f32 %v594, %v594
        %v863 = vmul.f32 %v599, %v599
        %v864 = vmul.f32 %v604, %v604
        %v865 = vmul.f32 %v609, %v609
        %v866 = vmul.f32 %v614, %v614
        %v867 = vmul.f32 %v619, %v619
        %v868 = vmul.f32 %v624, %v624
        %v869 = vmul.f32 %v629, %v629
        %v870 = vmul.f32 %v634, %v634
        %v871 = vmul.f32 %v639, %v639
        %v872 = vmul.f32 %v644, %v644
        %v873 = vmul.f32 %v649, %v649
        %v874 = vmul.f32 %v654, %v654
        %v875 = vmul.f32 %v659, %v659
        %v876 = vmul.f32 %v664, %v664
        %v877 = vmul.f32 %v669, %v669
        %v878 = vmul.f32 %v674, %v674
        %v879 = vmul.f32 %v679, %v679
        %v880 = vadd.f32 %v816, %v817
        %v881 = vadd.f32 %v880, %v818
        %v882 = vadd.f32 %v881, %v819
        %v883 = vadd.f32 %v882, %v820
        %v884 = vadd.f32 %v883, %v821
        %v885 = vadd.f32 %v884, %v822
        %v886 = vadd.f32 %v885, %v823
        %v887 = vadd.f32 %v886, %v824
        %v888 = vadd.f32 %v887, %v825
        %v889 = vadd.f32 %v888, %v826
        %v890 = vadd.f32 %v889, %v827
        %v891 = vadd.f32 %v890, %v828
        %v892 = vadd.f32 %v891, %v829
        %v893 = vadd.f32 %v892, %v830
        %v894 = vadd.f32 %v893, %v831
        %v895 = vadd.f32 %v894, %v832
        %v896 = vadd.f32 %v895, %v833
        %v897 = vadd.f32 %v896, %v834
        %v898 = vadd.f32 %v897, %v835
        %v899 = vadd.f32 %v898, %v836
        %v900 = vadd.f32 %v899, %v837
        %v901 = vadd.f32 %v900, %v838
        %v902 = vadd.f32 %v901, %v839
        %v903 = vadd.f32 %v902, %v840
        %v904 = vadd.f32 %v903, %v841
        %v905 = vadd.f32 %v904, %v842
        %v906 = vadd.f32 %v905, %v843
        %v907 = vadd.f32 %v906, %v844
        %v908 = vadd.f32 %v907, %v845
        %v909 = vadd.f32 %v908, %v846
        %v910 = vadd.f32 %v909, %v847
        %v911 = vadd.f32 %v910, %v848
        %v912 = vadd.f32 %v911, %v849
        %v913 = vadd.f32 %v912, %v850
        %v914 = vadd.f32 %v913, %v851
        %v915 = vadd.f32 %v914, %v852
        %v916 = vadd.f32 %v915, %v853
        %v917 = vadd.f32 %v916, %v854
        %v918 = vadd.f32 %v917, %v855
        %v919 = vadd.f32 %v918, %v856
        %v920 = vadd.f32 %v919, %v857
        %v921 = vadd.f32 %v920, %v858
        %v922 = vadd.f32 %v921, %v859
        %v923 = vadd.f32 %v922, %v860
        %v924 = vadd.f32 %v923, %v861
        %v925 = vadd.f32 %v924, %v862
        %v926 = vadd.f32 %v925, %v863
        %v927 = vadd.f32 %v926, %v864
        %v928 = vadd.f32 %v927, %v865
        %v929 = vadd.f32 %v928, %v866
        %v930 = vadd.f32 %v929, %v867
        %v931 = vadd.f32 %v930, %v868
        %v932 = vadd.f32 %v931, %v869
        %v933 = vadd.f32 %v932, %v870
        %v934 = vadd.f32 %v933, %v871
        %v935 = vadd.f32 %v934, %v872
        %v936 = vadd.f32 %v935, %v873
        %v937 = vadd.f32 %v936, %v874
        %v938 = vadd.f32 %v937, %v875
        %v939 = vadd.f32 %v938, %v876
        %v940 = vadd.f32 %v939, %v877
        %v941 = vadd.f32 %v940, %v878
        %v942 = vadd.f32 %v941, %v879
        %v943 = vrot.slane %v942, 4
        %v944 = vadd.f32 %v942, %v943
        %v945 = vrot.slane %v944, 2
        %v946 = vadd.f32 %v944, %v945
        %v947 = vrot.slane %v946, 1
        %v948 = vadd.f32 %v946, %v947
        %949 = vst [vmem:[%s214 + $0x1] sm:$0x1] %v948
        %s950 = sand.u32 %s80, 1
        %s951 = scalar_lea.sflag [#allocation4], %s950
        %s952 = sand.u32 %s80, 1
        %s953 = smul.addr %s952, 512
        %s954 = scalar_lea.vmem [#allocation7], %s953
        %s955 = sand.u32 %s106, 1
        %s956 = scalar_lea.sflag [#allocation9], %s955
        %s957 = sand.u32 %s106, 1
        %s958 = smul.addr %s957, 2
        %s959 = scalar_lea.vmem [#allocation8], %s958
        // Predicated region
        $region37: #{tpu_custom_call.1} parent=27 // pred_check
          %p960 = pneg %p90
        $region38: #{tpu_custom_call.1} parent=27 // pred_check_branch
          %962 = sbr.rel (%p960) target = $region40
        $region39: #{tpu_custom_call.1} parent=27 // pred_region
          %s963 = smul.u32 64, %s25
          %s965 = ssub.s32 8192, 8192
          %966 = vsyncadd %s951, %s965
          %s967 = smul.addr %s963, 128
          %s968 = scalar_lea.hbm %s2, %s967
          %s969 = sshll.u32 %s954, 4
          %s970 = int_to_ptr.vmem [resolvable:$true] %s969
          %975 = dma.vmem_to_hbm [thread:$0]  %s970, 8192, %s968, %s951, 128, 128, 8
        $region40: #{tpu_custom_call.1} parent=27 // pred_fallthru
          _
        // Predicated region
        $region41: #{tpu_custom_call.1} parent=27 // pred_check
          %p976 = pneg %p116
        $region42: #{tpu_custom_call.1} parent=27 // pred_check_branch
          %978 = sbr.rel (%p976) target = $region44
        $region43: #{tpu_custom_call.1} parent=27 // pred_region
          %s980 = ssub.s32 32, 32
          %981 = vsyncadd %s956, %s980
          %s982 = smul.addr %s25, 32
          %s983 = scalar_lea.hbm %s3, %s982
          %s985 = sshll.u32 %s959, 4
          %s986 = int_to_ptr.vmem [resolvable:$true] %s985
          %988 = dma.vmem_to_hbm [thread:$0]  %s986, 32, %s983, %s956
        $region44: #{tpu_custom_call.1} parent=27 // pred_fallthru
          _
      $region28: #{tpu_custom_call.1} parent=5 // pred_fallthru
        _
      %p989 = scmp.le.s32.totalorder 2, %s20
      // Predicated region
      $region45: #{tpu_custom_call.1} parent=5 // pred_check
        %p990 = pneg %p989
      $region46: #{tpu_custom_call.1} parent=5 // pred_check_branch
        %992 = sbr.rel (%p990) target = $region48
      $region47: #{tpu_custom_call.1} parent=5 // pred_region
        %s993 = ssub.s32 %s20, 2
        // Predicated region
        $region49: #{tpu_custom_call.1} parent=47 // pred_check
          %p994 = pneg %p96
        $region50: #{tpu_custom_call.1} parent=47 // pred_check_branch
          %996 = sbr.rel (%p994) target = $region52
        $region51: #{tpu_custom_call.1} parent=47 // pred_region
          %s997 = sand.u32 %s81, 1
          %s998 = scalar_lea.sflag [#allocation4], %s997
          %s999 = sand.u32 %s81, 1
          %s1000 = smul.addr %s999, 512
          %s1001 = scalar_lea.vmem [#allocation7], %s1000
          %1002 = dma.done %s998, 8192
        $region52: #{tpu_custom_call.1} parent=47 // pred_fallthru
          _
        // Predicated region
        $region53: #{tpu_custom_call.1} parent=47 // pred_check
          %p1003 = pneg %p122
        $region54: #{tpu_custom_call.1} parent=47 // pred_check_branch
          %1005 = sbr.rel (%p1003) target = $region56
        $region55: #{tpu_custom_call.1} parent=47 // pred_region
          %s1006 = sand.u32 %s107, 1
          %s1007 = scalar_lea.sflag [#allocation9], %s1006
          %s1008 = sand.u32 %s107, 1
          %s1009 = smul.addr %s1008, 2
          %s1010 = scalar_lea.vmem [#allocation8], %s1009
          %1011 = dma.done %s1007, 32
        $region56: #{tpu_custom_call.1} parent=47 // pred_fallthru
          _
      $region48: #{tpu_custom_call.1} parent=5 // pred_fallthru
        _
    $region6: #{tpu_custom_call.1} parent=1 // loop_footer
      %s24 = sadd.s32 1, %s20
    $region7: #{tpu_custom_call.1} parent=1 // loop_footer_branch
      %19 = sbr.rel target = $region3
    $region8: #{tpu_custom_call.1} parent=1 // loop_exit
      _
    %1012 = vsyncpa [#allocation3], 1
    %s1013 = scalar_lea.sflag [#allocation3], 1
    %1014 = vsyncpa %s1013, 1
    %1015 = vsyncpa [#allocation6], 1
    %1016 = vsyncpa [#allocation4], 1
    %s1017 = scalar_lea.sflag [#allocation4], 1
    %1018 = vsyncpa %s1017, 1
    %1019 = vsyncpa [#allocation9], 1
    %s1020 = scalar_lea.sflag [#allocation9], 1
    %1021 = vsyncpa %s1020, 1

</llo_original>
